<compile_context>
chip_gen: v5e
topology: v5e:2x2
jax: 0.10.0
libtpu: 0.0.40
codegen_flags: <defaults>
</compile_context>

<pallas_src>
import functools

import jax
import jax.numpy as jnp
from jax import lax
from jax.experimental import pallas as pl
from jax.experimental.pallas import tpu as pltpu

# Headroom above the 16/32 MiB scoped defaults, still below v7x's 64 MiB VMEM.
_VMEM_LIMIT = 48 * 1024 * 1024


def _pick_tile(dim, target, align):
    """Largest `align`-multiple divisor of `dim` that is <= target, else dim."""
    if dim <= target:
        return dim
    t = (target // align) * align
    while t >= align:
        if dim % t == 0:
            return t
        t -= align
    return dim


# ---------------------------------------------------------------------------
# Kernel 1: tiled linear layer  y = x @ W + b   (W already (in, out))
# ---------------------------------------------------------------------------
def _linear_kernel(x_ref, w_ref, b_ref, o_ref, acc_ref):
    k = pl.program_id(2)

    @pl.when(k == 0)
    def _():
        acc_ref[...] = jnp.zeros_like(acc_ref)

    acc_ref[...] += jnp.dot(x_ref[...], w_ref[...],
                            preferred_element_type=jnp.float32)

    @pl.when(k == pl.num_programs(2) - 1)
    def _():
        o_ref[...] = (acc_ref[...] + b_ref[...].astype(jnp.float32)
                      ).astype(o_ref.dtype)


def linear(x2d, w_io, b):
    """x2d: (M, Cin), w_io: (Cin, Cout), b: (Cout,) -> (M, Cout)."""
    M, Cin = x2d.shape
    Cout = w_io.shape[1]
    tm = _pick_tile(M, 512, 16)       # 16-aligned second-minor (bf16 packing)
    tn = _pick_tile(Cout, 512, 128)
    tk = _pick_tile(Cin, 512, 128)
    b2d = b.reshape(1, Cout)

    itemsize = jnp.dtype(x2d.dtype).itemsize
    cost = pl.CostEstimate(
        flops=2 * M * Cin * Cout,
        transcendentals=0,
        bytes_accessed=(M * Cin + Cin * Cout + M * Cout + Cout) * itemsize)

    return pl.pallas_call(
        _linear_kernel,
        out_shape=jax.ShapeDtypeStruct((M, Cout), x2d.dtype),
        grid_spec=pltpu.PrefetchScalarGridSpec(
            num_scalar_prefetch=0,
            grid=(M // tm, Cout // tn, Cin // tk),
            in_specs=[
                pl.BlockSpec((tm, tk), lambda i, j, k: (i, k)),
                pl.BlockSpec((tk, tn), lambda i, j, k: (k, j)),
                pl.BlockSpec((1, tn), lambda i, j, k: (0, j)),
            ],
            out_specs=pl.BlockSpec((tm, tn), lambda i, j, k: (i, j)),
            scratch_shapes=[pltpu.VMEM((tm, tn), jnp.float32)],
        ),
        compiler_params=pltpu.CompilerParams(
            dimension_semantics=("parallel", "parallel", "arbitrary"),
            vmem_limit_bytes=_VMEM_LIMIT),
        cost_estimate=cost,
    )(x2d, w_io, b2d)


# ---------------------------------------------------------------------------
# Kernel 2: flash-style attention over the fused qkv activation.
# One grid step = (batch, q-tile, kv-tile); all heads handled inside the step;
# accumulator and output blocks are lane-dense (tq, C).
# ---------------------------------------------------------------------------
def _flash_attn_kernel(q_ref, k_ref, v_ref, o_ref,
                       m_ref, l_ref, acc_ref, pv_ref, *,
                       num_heads, head_dim):
    ki = pl.program_id(2)
    embed = num_heads * head_dim

    @pl.when(ki == 0)
    def _():
        m_ref[...] = jnp.full_like(m_ref, -jnp.inf)
        l_ref[...] = jnp.zeros_like(l_ref)
        acc_ref[...] = jnp.zeros_like(acc_ref)

    # (H, C) 0/1 expansion matrix: expand[h, h*D:(h+1)*D] = 1.  Broadcasts a
    # per-head (tq, 1) scalar column to a lane-dense (tq, C) slab via one tiny
    # MXU matmul (contraction depth = H), so acc/o updates stay unmasked.
    lane_head = lax.broadcasted_iota(jnp.int32, (num_heads, embed), 1) // head_dim
    row_head = lax.broadcasted_iota(jnp.int32, (num_heads, embed), 0)
    expand = (lane_head == row_head).astype(jnp.float32)

    # Per-head online-softmax step.  num_heads is a small static int; the loop
    # is unrolled but every per-head partial (pv, m, l) is committed to scratch
    # immediately so live ranges stay bounded per head.
    # TODO(synk): switch to lax.fori_loop once dynamic lane-offset ref slices
    # (pl.ds on the minormost dim) lower reliably in Mosaic.
    alphas = []
    for h in range(num_heads):
        lo = h * head_dim
        hi = lo + head_dim
        q_h = q_ref[0, :, lo:hi]                    # (tq, D); scale pre-folded
        k_h = k_ref[0, :, lo:hi]                    # (tkv, D)
        v_h = v_ref[0, :, lo:hi]                    # (tkv, D)

        # q . k^T via dot_general contracting last dims (no explicit k.T).
        s = lax.dot_general(q_h, k_h, (((1,), (1,)), ((), ())),
                            preferred_element_type=jnp.float32)   # (tq, tkv)

        m_prev = m_ref[h]                                         # (tq, 1)
        m_new = jnp.maximum(m_prev, jnp.max(s, axis=-1, keepdims=True))
        alpha = jnp.exp(m_prev - m_new)                           # (tq, 1)
        p = jnp.exp(s - m_new)                                    # (tq, tkv)

        l_ref[h] = alpha * l_ref[h] + jnp.sum(p, axis=-1, keepdims=True)
        m_ref[h] = m_new
        pv_ref[:, lo:hi] = jnp.dot(p.astype(v_h.dtype), v_h,
                                   preferred_element_type=jnp.float32)
        alphas.append(alpha)

    # Single lane-dense RMW of the persistent accumulator (no per-head masked
    # loads/stores on acc): alpha_full[:, h*D:(h+1)*D] == alpha_h.
    alpha_full = jnp.dot(jnp.concatenate(alphas, axis=-1), expand,
                         preferred_element_type=jnp.float32)      # (tq, C)
    acc_ref[...] = alpha_full * acc_ref[...] + pv_ref[...]

    @pl.when(ki == pl.num_programs(2) - 1)
    def _():
        l_mat = jnp.concatenate([l_ref[h] for h in range(num_heads)], axis=-1)
        inv_full = jnp.dot(pl.reciprocal(l_mat, approx=True), expand,
                           preferred_element_type=jnp.float32)    # (tq, C)
        # One lane-dense (tq, C) store instead of H head_dim-wide stores.
        o_ref[0] = (acc_ref[...] * inv_full).astype(o_ref.dtype)


def attention(qkv3, num_heads):
    """qkv3: (B, N, 3C), layout [q|k|v] on the last axis, heads packed inside
    each C block.  Returns (B, N, C)."""
    B, N, C3 = qkv3.shape
    C = C3 // 3
    head_dim = C // num_heads

    tq = _pick_tile(N, 512, 16)
    tkv = _pick_tile(N, 512, 16)
    # v7x has 2 TensorCores: keep >= 2 parallel grid slices when possible.
    if B * (N // tq) < 2 and tq % 2 == 0 and (tq // 2) % 16 == 0:
        tq //= 2

    if C % 128 == 0:
        # Zero-copy q/k/v selection: block index 0/1/2 along the last axis of
        # the fused (B, N, 3C) activation — no XLA-level slicing/copying.
        arrays = (qkv3, qkv3, qkv3)
        q_spec = pl.BlockSpec((1, tq, C), lambda b, qi, ki: (b, qi, 0))
        k_spec = pl.BlockSpec((1, tkv, C), lambda b, qi, ki: (b, ki, 1))
        v_spec = pl.BlockSpec((1, tkv, C), lambda b, qi, ki: (b, ki, 2))
    else:
        # TODO(synk): lane-unaligned C falls back to XLA slices (copies); pad
        # the embed dim to a multiple of 128 to stay on the zero-copy path.
        arrays = (qkv3[..., :C], qkv3[..., C:2 * C], qkv3[..., 2 * C:])
        q_spec = pl.BlockSpec((1, tq, C), lambda b, qi, ki: (b, qi, 0))
        k_spec = pl.BlockSpec((1, tkv, C), lambda b, qi, ki: (b, ki, 0))
        v_spec = pl.BlockSpec((1, tkv, C), lambda b, qi, ki: (b, ki, 0))

    o_spec = pl.BlockSpec((1, tq, C), lambda b, qi, ki: (b, qi, 0))
    kernel = functools.partial(_flash_attn_kernel, num_heads=num_heads,
                               head_dim=head_dim)

    itemsize = jnp.dtype(qkv3.dtype).itemsize
    cost = pl.CostEstimate(
        flops=4 * B * N * N * C,
        transcendentals=B * num_heads * N * N,
        bytes_accessed=(3 * B * N * C + B * N * C) * itemsize)

    return pl.pallas_call(
        kernel,
        out_shape=jax.ShapeDtypeStruct((B, N, C), qkv3.dtype),
        grid_spec=pltpu.PrefetchScalarGridSpec(
            num_scalar_prefetch=0,
            grid=(B, N // tq, N // tkv),
            in_specs=[q_spec, k_spec, v_spec],
            out_specs=o_spec,
            scratch_shapes=[
                pltpu.VMEM((num_heads, tq, 1), jnp.float32),   # running max m
                pltpu.VMEM((num_heads, tq, 1), jnp.float32),   # running sum l
                pltpu.VMEM((tq, C), jnp.float32),              # acc (all heads)
                pltpu.VMEM((tq, C), jnp.float32),              # per-step p@v staging
            ],
        ),
        compiler_params=pltpu.CompilerParams(
            dimension_semantics=("parallel", "parallel", "arbitrary"),
            vmem_limit_bytes=_VMEM_LIMIT),
        cost_estimate=cost,
    )(*arrays)


# ---------------------------------------------------------------------------
# Module wrapper (only cheap reshapes / trace-time weight folding in plain JAX)
# ---------------------------------------------------------------------------
def multi_head_attention(x, params, num_heads):
    B, N, C = x.shape
    head_dim = C // num_heads
    scale = head_dim ** (-0.5)

    w_qkv, b_qkv = params["w_qkv"], params["b_qkv"]       # (3C, C), (3C,)
    w_proj, b_proj = params["w_proj"], params["b_proj"]   # (C, C), (C,)

    # Fold the softmax scale into the q-part of the fused projection so the
    # attention kernel never rescales the resident q tile.
    scale_vec = jnp.concatenate([
        jnp.full((C,), scale, dtype=w_qkv.dtype),
        jnp.ones((2 * C,), dtype=w_qkv.dtype)])
    w_fused = (w_qkv * scale_vec[:, None]).T              # (C, 3C)
    b_fused = b_qkv * scale_vec

    x2d = x.reshape(B * N, C)
    # Single fused qkv projection: x read from HBM once, one kernel launch.
    qkv3 = linear(x2d, w_fused, b_fused).reshape(B, N, 3 * C)

    out = attention(qkv3, num_heads)                      # (B, N, C)

    y = linear(out.reshape(B * N, C), w_proj.T, b_proj)   # (B*N, C)
    return y.reshape(B, N, C)


# ---------------------------------------------------------------------------
# Pure-JAX reference (mirrors the PyTorch forward exactly)
# ---------------------------------------------------------------------------
def reference(x, params, num_heads):
    B, N, C = x.shape
    head_dim = C // num_heads
    scale = head_dim ** (-0.5)
    qkv = x @ params["w_qkv"].T + params["b_qkv"]
    qkv = qkv.reshape(B, N, 3, num_heads, head_dim)
    qkv = jnp.transpose(qkv, (2, 0, 3, 1, 4))
    q, k, v = qkv[0], qkv[1], qkv[2]
    attn = (q @ jnp.swapaxes(k, -2, -1)) * scale
    attn = jax.nn.softmax(attn, axis=-1)
    out = attn @ v
    out = jnp.transpose(out, (0, 2, 1, 3)).reshape(B, N, C)
    return out @ params["w_proj"].T + params["b_proj"]


if __name__ == "__main__":
    B, N, C, H = 2, 8, 128, 4   # head_dim = 32; C is 128-aligned (lane-dense)

    key = jax.random.PRNGKey(0)
    kx, k1, k2, k3, k4 = jax.random.split(key, 5)

    x = jax.random.normal(kx, (B, N, C), dtype=jnp.float32)

    # PyTorch nn.Linear weight shape is (out, in).
    params = {
        "w_qkv": jax.random.normal(k1, (3 * C, C), dtype=jnp.float32) * 0.05,
        "b_qkv": jax.random.normal(k2, (3 * C,), dtype=jnp.float32) * 0.05,
        "w_proj": jax.random.normal(k3, (C, C), dtype=jnp.float32) * 0.05,
        "b_proj": jax.random.normal(k4, (C,), dtype=jnp.float32) * 0.05,
    }

    y = jax.block_until_ready(multi_head_attention(x, params, H))
    y_ref = reference(x, params, H)

    assert y.shape == (B, N, C)
    err = jnp.max(jnp.abs(y - y_ref))
    assert jnp.allclose(y, y_ref, atol=2e-3, rtol=2e-3), f"max err = {err}"

    print("KERNEL_OK")
</pallas_src>

<mosaic_0001>
module attributes {stable_mosaic.version = 11 : i64} {
  func.func @_linear_kernel(%arg0: i32, %arg1: i32, %arg2: i32, %arg3: memref<16x128xf32, #tpu.memory_space<vmem>>, %arg4: memref<128x384xf32, #tpu.memory_space<vmem>>, %arg5: memref<1x384xf32, #tpu.memory_space<vmem>>, %arg6: memref<16x384xf32, #tpu.memory_space<vmem>>, %arg7: memref<16x384xf32, #tpu.memory_space<vmem>>) attributes {dimension_semantics = [#tpu.dimension_semantics<parallel>, #tpu.dimension_semantics<parallel>, #tpu.dimension_semantics<arbitrary>], iteration_bounds = array<i64: 1, 1, 1>, scalar_prefetch = 0 : i64, scratch_operands = 1 : i64, tpu.core_type = #tpu.core_type<tc>, window_params = [{transform_indices = @transform_0, window_bounds = array<i64: 16, 128>}, {transform_indices = @transform_1, window_bounds = array<i64: 128, 384>}, {transform_indices = @transform_2, window_bounds = array<i64: 1, 384>}, {transform_indices = @transform_3, window_bounds = array<i64: 16, 384>}]} {
    %c0_i32 = arith.constant 0 : i32
    %0 = arith.cmpi eq, %arg2, %c0_i32 : i32
    %1 = arith.extui %0 : i1 to i32
    %c0_i32_0 = arith.constant 0 : i32
    %2 = arith.cmpi ne, %1, %c0_i32_0 : i32
    scf.if %2 {
      %cst_10 = arith.constant 0.000000e+00 : f32
      %12 = vector.broadcast %cst_10 : f32 to vector<16x384xf32>
      %c0_11 = arith.constant 0 : index
      %c0_12 = arith.constant 0 : index
      %13 = vector.load %arg7[%c0_11, %c0_12] : memref<16x384xf32, #tpu.memory_space<vmem>>, vector<16x384xf32>
      tpu.vector_store %arg7[%c0_11, %c0_12], %12 {strides = array<i32>} : memref<16x384xf32, #tpu.memory_space<vmem>>, vector<16x384xf32>,
    } else {
    }
    %c0 = arith.constant 0 : index
    %c0_1 = arith.constant 0 : index
    %3 = vector.load %arg7[%c0, %c0_1] : memref<16x384xf32, #tpu.memory_space<vmem>>, vector<16x384xf32>
    %c0_2 = arith.constant 0 : index
    %c0_3 = arith.constant 0 : index
    %4 = vector.load %arg3[%c0_2, %c0_3] : memref<16x128xf32, #tpu.memory_space<vmem>>, vector<16x128xf32>
    %c0_4 = arith.constant 0 : index
    %c0_5 = arith.constant 0 : index
    %5 = vector.load %arg4[%c0_4, %c0_5] : memref<128x384xf32, #tpu.memory_space<vmem>>, vector<128x384xf32>
    %cst = arith.constant dense<0.000000e+00> : vector<16x384xf32>
    %6 = tpu.matmul %4, %5, %cst {dimension_numbers = #tpu.dot_dimension_numbers<[1], [0], [0], [1], [0, 0, 1, 1], [], []>} : vector<16x128xf32>, vector<128x384xf32>, vector<16x384xf32> -> vector<16x384xf32>
    %7 = arith.addf %3, %6 : vector<16x384xf32>
    %c0_6 = arith.constant 0 : index
    %c0_7 = arith.constant 0 : index
    %8 = vector.load %arg7[%c0_6, %c0_7] : memref<16x384xf32, #tpu.memory_space<vmem>>, vector<16x384xf32>
    tpu.vector_store %arg7[%c0_6, %c0_7], %7 {strides = array<i32>} : memref<16x384xf32, #tpu.memory_space<vmem>>, vector<16x384xf32>,
    %c0_i32_8 = arith.constant 0 : i32
    %9 = arith.cmpi eq, %arg2, %c0_i32_8 : i32
    %10 = arith.extui %9 : i1 to i32
    %c0_i32_9 = arith.constant 0 : i32
    %11 = arith.cmpi ne, %10, %c0_i32_9 : i32
    scf.if %11 {
      %c0_10 = arith.constant 0 : index
      %c0_11 = arith.constant 0 : index
      %12 = vector.load %arg7[%c0_10, %c0_11] : memref<16x384xf32, #tpu.memory_space<vmem>>, vector<16x384xf32>
      %c0_12 = arith.constant 0 : index
      %c0_13 = arith.constant 0 : index
      %13 = vector.load %arg5[%c0_12, %c0_13] : memref<1x384xf32, #tpu.memory_space<vmem>>, vector<1x384xf32>
      %14 = vector.broadcast %13 : vector<1x384xf32> to vector<16x384xf32>
      %15 = arith.addf %12, %14 : vector<16x384xf32>
      %c0_14 = arith.constant 0 : index
      %c0_15 = arith.constant 0 : index
      %16 = vector.load %arg6[%c0_14, %c0_15] : memref<16x384xf32, #tpu.memory_space<vmem>>, vector<16x384xf32>
      tpu.vector_store %arg6[%c0_14, %c0_15], %15 {strides = array<i32>} : memref<16x384xf32, #tpu.memory_space<vmem>>, vector<16x384xf32>,
    } else {
    }
    return
  }
  func.func @transform_0(%arg0: i32, %arg1: i32, %arg2: i32) -> (i32, i32) {
    %c0_i32 = arith.constant 0 : i32
    return %arg0, %arg2 : i32, i32
  }
  func.func @transform_1(%arg0: i32, %arg1: i32, %arg2: i32) -> (i32, i32) {
    %c0_i32 = arith.constant 0 : i32
    return %arg2, %arg1 : i32, i32
  }
  func.func @transform_2(%arg0: i32, %arg1: i32, %arg2: i32) -> (i32, i32) {
    %c0_i32 = arith.constant 0 : i32
    %c0_i32_0 = arith.constant 0 : i32
    return %c0_i32, %arg1 : i32, i32
  }
  func.func @transform_3(%arg0: i32, %arg1: i32, %arg2: i32) -> (i32, i32) {
    %c0_i32 = arith.constant 0 : i32
    return %arg0, %arg1 : i32, i32
  }
}

</mosaic_0001>

<llo_original>
// kernel: tpu_custom_call.1
$region0: #{tpu_custom_call.1}
  #allocation0 [shape = 'u32[]', space=smem, size = 0x4, offset = 0x4, fixed_abs, tag = 'smem constant byte address 0x4 - core index']
  #allocation1 [shape = 'u32[72,128]{1,0:T(1,128)}', space=vmem, size = 0x9000, scoped, tag = 'internal scratch']
  #allocation2 [shape = 'f32[16,384]{1,0:T(8,128)}', space=vmem, size = 0x6000, scoped, tag = 'scratch operand']
  %s0 = inlined_call_operand.hbm [shape: f32[16,128], index: 0, kind: input, shape index: {}]
  %s1 = inlined_call_operand.hbm [shape: f32[128,384], index: 1, kind: input, shape index: {}]
  %s2 = inlined_call_operand.hbm [shape: f32[1,384], index: 2, kind: input, shape index: {}]
  %s3 = inlined_call_operand.hbm [shape: f32[16,384], index: 3, kind: output, shape index: {}]
  %s4 = sld [smem:[#allocation0]]
  $region42: #{tpu_custom_call.1} parent=0
    _
  %s6 = ssub.s32 1, %s4
  %s7 = scalar_select 0, %s6, %s4
  $region1: #{tpu_custom_call.1} parent=0
    #allocation3 [shape = 'u8[8192]{0}', space=vmem, size = 0x2000, scoped, tag = 'input window, operand 0, single buffered']
    #allocation4 [shape = 's32[1]{0}', space=sflag, size = 0x4, scoped, tag = 'scoped memory for tpu_custom_call.1']
    #allocation5 [shape = 's32[1]{0}', space=sflag, size = 0x4, scoped, tag = 'scoped memory for tpu_custom_call.1']
    #allocation6 [shape = 'u8[196608]{0}', space=vmem, size = 0x30000, scoped, tag = 'input window, operand 1, single buffered']
    #allocation7 [shape = 's32[1]{0}', space=sflag, size = 0x4, scoped, tag = 'scoped memory for tpu_custom_call.1']
    #allocation8 [shape = 'u8[1536]{0}', space=vmem, size = 0x800, scoped, tag = 'input window, operand 2, single buffered']
    #allocation9 [shape = 'u8[24576]{0}', space=vmem, size = 0x6000, scoped, tag = 'output window, operand 0, single buffered']
    %8 = vsyncpa [#allocation4], 0
    %9 = vsyncpa [#allocation7], 0
    %10 = vsyncpa [#allocation5], 0
    // Predicated region
    $region2: #{tpu_custom_call.1} parent=1 // pred_check
      _
    $region3: #{tpu_custom_call.1} parent=1 // pred_check_branch
      %12 = sbr.rel (0) target = $region5
    $region4: #{tpu_custom_call.1} parent=1 // pred_region
      %14 = vsyncadd [#allocation4], 0
      %s15 = sshll.u32 %s0, 4
      %s16 = int_to_ptr.hbm [resolvable:$true] %s15
      %s17 = sshll.u32 [#allocation3], 4
      %s18 = int_to_ptr.vmem [resolvable:$true] %s17
      %23 = dma.hbm_to_vmem [thread:$0]  %s16, 256, %s18, [#allocation4], 128, 128, 8
    $region5: #{tpu_custom_call.1} parent=1 // pred_fallthru
      _
    // Predicated region
    $region6: #{tpu_custom_call.1} parent=1 // pred_check
      _
    $region7: #{tpu_custom_call.1} parent=1 // pred_check_branch
      %25 = sbr.rel (0) target = $region9
    $region8: #{tpu_custom_call.1} parent=1 // pred_region
      %27 = vsyncadd [#allocation7], 0
      %s28 = sshll.u32 %s1, 4
      %s29 = int_to_ptr.hbm [resolvable:$true] %s28
      %s30 = sshll.u32 [#allocation6], 4
      %s31 = int_to_ptr.vmem [resolvable:$true] %s30
      %36 = dma.hbm_to_vmem [thread:$0]  %s29, 6144, %s31, [#allocation7], 384, 384, 24
    $region9: #{tpu_custom_call.1} parent=1 // pred_fallthru
      _
    // Predicated region
    $region10: #{tpu_custom_call.1} parent=1 // pred_check
      _
    $region11: #{tpu_custom_call.1} parent=1 // pred_check_branch
      %38 = sbr.rel (0) target = $region13
    $region12: #{tpu_custom_call.1} parent=1 // pred_region
      %40 = vsyncadd [#allocation7], 0
      %s42 = sshll.u32 %s2, 4
      %s43 = int_to_ptr.hbm [resolvable:$true] %s42
      %s44 = sshll.u32 [#allocation8], 4
      %s45 = int_to_ptr.vmem [resolvable:$true] %s44
      %47 = dma.hbm_to_vmem [thread:$0]  %s43, 48, %s45, [#allocation7]
    $region13: #{tpu_custom_call.1} parent=1 // pred_fallthru
      _
    // Predicated region
    $region14: #{tpu_custom_call.1} parent=1 // pred_check
      _
    $region15: #{tpu_custom_call.1} parent=1 // pred_check_branch
      %49 = sbr.rel (0) target = $region17
    $region16: #{tpu_custom_call.1} parent=1 // pred_region
      %51 = dma.done [#allocation4], 256
    $region17: #{tpu_custom_call.1} parent=1 // pred_fallthru
      _
    // Predicated region
    $region18: #{tpu_custom_call.1} parent=1 // pred_check
      _
    $region19: #{tpu_custom_call.1} parent=1 // pred_check_branch
      %53 = sbr.rel (0) target = $region21
    $region20: #{tpu_custom_call.1} parent=1 // pred_region
      %55 = dma.done [#allocation7], 6144
    $region21: #{tpu_custom_call.1} parent=1 // pred_fallthru
      _
    // Predicated region
    $region22: #{tpu_custom_call.1} parent=1 // pred_check
      _
    $region23: #{tpu_custom_call.1} parent=1 // pred_check_branch
      %57 = sbr.rel (0) target = $region25
    $region24: #{tpu_custom_call.1} parent=1 // pred_region
      %59 = dma.done [#allocation7], 48
    $region25: #{tpu_custom_call.1} parent=1 // pred_fallthru
      _
    %p60 = scmp.eq.s32.totalorder 0, 0
    // Predicated region
    $region26: #{tpu_custom_call.1} parent=1 // pred_check
      %p61 = pneg %p60
    $region27: #{tpu_custom_call.1} parent=1 // pred_check_branch
      %63 = sbr.rel (%p61) target = $region29
    $region28: #{tpu_custom_call.1} parent=1 // pred_region
      %64 = vst [vmem:[#allocation2] sm:$0xff] 0.0
      %65 = vst [vmem:[#allocation2 + $0x8] sm:$0xff] 0.0
      %66 = vst [vmem:[#allocation2 + $0x10] sm:$0xff] 0.0
      %67 = vst [vmem:[#allocation2 + $0x18] sm:$0xff] 0.0
      %68 = vst [vmem:[#allocation2 + $0x20] sm:$0xff] 0.0
      %69 = vst [vmem:[#allocation2 + $0x28] sm:$0xff] 0.0
    $region29: #{tpu_custom_call.1} parent=1 // pred_fallthru
      _
    %v70 = vld [vmem:[#allocation2] sm:$0xff]
    %v71 = vld [vmem:[#allocation2 + $0x8] sm:$0xff]
    %v72 = vld [vmem:[#allocation2 + $0x10] sm:$0xff]
    %v73 = vld [vmem:[#allocation2 + $0x18] sm:$0xff]
    %v74 = vld [vmem:[#allocation2 + $0x20] sm:$0xff]
    %v75 = vld [vmem:[#allocation2 + $0x28] sm:$0xff]
    %v76 = vld [vmem:[#allocation3] sm:$0xff]
    %v77 = vld [vmem:[#allocation3 + $0x8] sm:$0xff]
    %v78 = vld [vmem:[#allocation6] sm:$0xff]
    %v79 = vld [vmem:[#allocation6 + $0x8] sm:$0xff]
    %v80 = vld [vmem:[#allocation6 + $0x10] sm:$0xff]
    %v81 = vld [vmem:[#allocation6 + $0x18] sm:$0xff]
    %v82 = vld [vmem:[#allocation6 + $0x20] sm:$0xff]
    %v83 = vld [vmem:[#allocation6 + $0x28] sm:$0xff]
    %v84 = vld [vmem:[#allocation6 + $0x30] sm:$0xff]
    %v85 = vld [vmem:[#allocation6 + $0x38] sm:$0xff]
    %v86 = vld [vmem:[#allocation6 + $0x40] sm:$0xff]
    %v87 = vld [vmem:[#allocation6 + $0x48] sm:$0xff]
    %v88 = vld [vmem:[#allocation6 + $0x50] sm:$0xff]
    %v89 = vld [vmem:[#allocation6 + $0x58] sm:$0xff]
    %v90 = vld [vmem:[#allocation6 + $0x60] sm:$0xff]
    %v91 = vld [vmem:[#allocation6 + $0x68] sm:$0xff]
    %v92 = vld [vmem:[#allocation6 + $0x70] sm:$0xff]
    %v93 = vld [vmem:[#allocation6 + $0x78] sm:$0xff]
    %v94 = vld [vmem:[#allocation6 + $0x80] sm:$0xff]
    %v95 = vld [vmem:[#allocation6 + $0x88] sm:$0xff]
    %v96 = vld [vmem:[#allocation6 + $0x90] sm:$0xff]
    %v97 = vld [vmem:[#allocation6 + $0x98] sm:$0xff]
    %v98 = vld [vmem:[#allocation6 + $0xa0] sm:$0xff]
    %v99 = vld [vmem:[#allocation6 + $0xa8] sm:$0xff]
    %v100 = vld [vmem:[#allocation6 + $0xb0] sm:$0xff]
    %v101 = vld [vmem:[#allocation6 + $0xb8] sm:$0xff]
    %v102 = vld [vmem:[#allocation6 + $0xc0] sm:$0xff]
    %v103 = vld [vmem:[#allocation6 + $0xc8] sm:$0xff]
    %v104 = vld [vmem:[#allocation6 + $0xd0] sm:$0xff]
    %v105 = vld [vmem:[#allocation6 + $0xd8] sm:$0xff]
    %v106 = vld [vmem:[#allocation6 + $0xe0] sm:$0xff]
    %v107 = vld [vmem:[#allocation6 + $0xe8] sm:$0xff]
    %v108 = vld [vmem:[#allocation6 + $0xf0] sm:$0xff]
    %v109 = vld [vmem:[#allocation6 + $0xf8] sm:$0xff]
    %v110 = vld [vmem:[#allocation6 + $0x100] sm:$0xff]
    %v111 = vld [vmem:[#allocation6 + $0x108] sm:$0xff]
    %v112 = vld [vmem:[#allocation6 + $0x110] sm:$0xff]
    %v113 = vld [vmem:[#allocation6 + $0x118] sm:$0xff]
    %v114 = vld [vmem:[#allocation6 + $0x120] sm:$0xff]
    %v115 = vld [vmem:[#allocation6 + $0x128] sm:$0xff]
    %v116 = vld [vmem:[#allocation6 + $0x130] sm:$0xff]
    %v117 = vld [vmem:[#allocation6 + $0x138] sm:$0xff]
    %v118 = vld [vmem:[#allocation6 + $0x140] sm:$0xff]
    %v119 = vld [vmem:[#allocation6 + $0x148] sm:$0xff]
    %v120 = vld [vmem:[#allocation6 + $0x150] sm:$0xff]
    %v121 = vld [vmem:[#allocation6 + $0x158] sm:$0xff]
    %v122 = vld [vmem:[#allocation6 + $0x160] sm:$0xff]
    %v123 = vld [vmem:[#allocation6 + $0x168] sm:$0xff]
    %v124 = vld [vmem:[#allocation6 + $0x170] sm:$0xff]
    %v125 = vld [vmem:[#allocation6 + $0x178] sm:$0xff]
    %126 = vmatpush.msra.mxu0 %v123
    %127 = vmatpush.msra.mxu0 %v120
    %128 = vmatpush.msra.mxu0 %v117
    %129 = vmatpush.msra.mxu0 %v114
    %130 = vmatpush.msra.mxu0 %v111
    %131 = vmatpush.msra.mxu0 %v108
    %132 = vmatpush.msra.mxu0 %v105
    %133 = vmatpush.msra.mxu0 %v102
    %134 = vmatpush.msra.mxu0 %v99
    %135 = vmatpush.msra.mxu0 %v96
    %136 = vmatpush.msra.mxu0 %v93
    %137 = vmatpush.msra.mxu0 %v90
    %138 = vmatpush.msra.mxu0 %v87
    %139 = vmatpush.msra.mxu0 %v84
    %140 = vmatpush.msra.mxu0 %v81
    %141 = vmatpush.msra.mxu0 %v78
    %142 = vmatmul.f32.gmra.mxu0 %v76
    %v143 = vpop.f32.mrf.mxu0
    %v144 = vadd.f32 0.0, %v143
    %145 = vmatmul.f32.gmra.mxu0 %v77
    %v146 = vpop.f32.mrf.mxu0
    %v147 = vadd.f32 0.0, %v146
    %148 = vdwg.mxu0
    %149 = vmatpush.msra.mxu0 %v124
    %150 = vmatpush.msra.mxu0 %v121
    %151 = vmatpush.msra.mxu0 %v118
    %152 = vmatpush.msra.mxu0 %v115
    %153 = vmatpush.msra.mxu0 %v112
    %154 = vmatpush.msra.mxu0 %v109
    %155 = vmatpush.msra.mxu0 %v106
    %156 = vmatpush.msra.mxu0 %v103
    %157 = vmatpush.msra.mxu0 %v100
    %158 = vmatpush.msra.mxu0 %v97
    %159 = vmatpush.msra.mxu0 %v94
    %160 = vmatpush.msra.mxu0 %v91
    %161 = vmatpush.msra.mxu0 %v88
    %162 = vmatpush.msra.mxu0 %v85
    %163 = vmatpush.msra.mxu0 %v82
    %164 = vmatpush.msra.mxu0 %v79
    %165 = vmatmul.f32.gmra.mxu0 %v76
    %v166 = vpop.f32.mrf.mxu0
    %v167 = vadd.f32 0.0, %v166
    %168 = vmatmul.f32.gmra.mxu0 %v77
    %v169 = vpop.f32.mrf.mxu0
    %v170 = vadd.f32 0.0, %v169
    %171 = vdwg.mxu0
    %172 = vmatpush.msra.mxu0 %v125
    %173 = vmatpush.msra.mxu0 %v122
    %174 = vmatpush.msra.mxu0 %v119
    %175 = vmatpush.msra.mxu0 %v116
    %176 = vmatpush.msra.mxu0 %v113
    %177 = vmatpush.msra.mxu0 %v110
    %178 = vmatpush.msra.mxu0 %v107
    %179 = vmatpush.msra.mxu0 %v104
    %180 = vmatpush.msra.mxu0 %v101
    %181 = vmatpush.msra.mxu0 %v98
    %182 = vmatpush.msra.mxu0 %v95
    %183 = vmatpush.msra.mxu0 %v92
    %184 = vmatpush.msra.mxu0 %v89
    %185 = vmatpush.msra.mxu0 %v86
    %186 = vmatpush.msra.mxu0 %v83
    %187 = vmatpush.msra.mxu0 %v80
    %188 = vmatmul.f32.gmra.mxu0 %v76
    %v189 = vpop.f32.mrf.mxu0
    %v190 = vadd.f32 0.0, %v189
    %191 = vmatmul.f32.gmra.mxu0 %v77
    %v192 = vpop.f32.mrf.mxu0
    %v193 = vadd.f32 0.0, %v192
    %194 = vdwg.mxu0
    %v195 = vadd.f32 %v70, %v144
    %v196 = vadd.f32 %v71, %v167
    %v197 = vadd.f32 %v72, %v190
    %v198 = vadd.f32 %v73, %v147
    %v199 = vadd.f32 %v74, %v170
    %v200 = vadd.f32 %v75, %v193
    %201 = vst [vmem:[#allocation2] sm:$0xff] %v195
    %202 = vst [vmem:[#allocation2 + $0x8] sm:$0xff] %v196
    %203 = vst [vmem:[#allocation2 + $0x10] sm:$0xff] %v197
    %204 = vst [vmem:[#allocation2 + $0x18] sm:$0xff] %v198
    %205 = vst [vmem:[#allocation2 + $0x20] sm:$0xff] %v199
    %206 = vst [vmem:[#allocation2 + $0x28] sm:$0xff] %v200
    // Predicated region
    $region30: #{tpu_custom_call.1} parent=1 // pred_check
      %p207 = pneg %p60
    $region31: #{tpu_custom_call.1} parent=1 // pred_check_branch
      %209 = sbr.rel (%p207) target = $region33
    $region32: #{tpu_custom_call.1} parent=1 // pred_region
      %v210 = vld [vmem:[#allocation2] sm:$0xff]
      %v211 = vld [vmem:[#allocation2 + $0x8] sm:$0xff]
      %v212 = vld [vmem:[#allocation2 + $0x10] sm:$0xff]
      %v213 = vld [vmem:[#allocation2 + $0x18] sm:$0xff]
      %v214 = vld [vmem:[#allocation2 + $0x20] sm:$0xff]
      %v215 = vld [vmem:[#allocation2 + $0x28] sm:$0xff]
      %v216 = vld [vmem:[#allocation8] sm:$0x7]
      %v218 = vperm.slane %v216, 0
      %v219 = vperm.slane %v216, 1
      %v220 = vperm.slane %v216, 2
      %v224 = vadd.f32 %v210, %v218
      %v225 = vadd.f32 %v211, %v219
      %v226 = vadd.f32 %v212, %v220
      %v227 = vadd.f32 %v213, %v218
      %v228 = vadd.f32 %v214, %v219
      %v229 = vadd.f32 %v215, %v220
      %230 = vst [vmem:[#allocation9] sm:$0xff] %v224
      %231 = vst [vmem:[#allocation9 + $0x8] sm:$0xff] %v225
      %232 = vst [vmem:[#allocation9 + $0x10] sm:$0xff] %v226
      %233 = vst [vmem:[#allocation9 + $0x18] sm:$0xff] %v227
      %234 = vst [vmem:[#allocation9 + $0x20] sm:$0xff] %v228
      %235 = vst [vmem:[#allocation9 + $0x28] sm:$0xff] %v229
    $region33: #{tpu_custom_call.1} parent=1 // pred_fallthru
      _
    // Predicated region
    $region34: #{tpu_custom_call.1} parent=1 // pred_check
      _
    $region35: #{tpu_custom_call.1} parent=1 // pred_check_branch
      %237 = sbr.rel (0) target = $region37
    $region36: #{tpu_custom_call.1} parent=1 // pred_region
      %239 = vsyncadd [#allocation5], 0
      %s240 = sshll.u32 [#allocation9], 4
      %s241 = int_to_ptr.vmem [resolvable:$true] %s240
      %s242 = sshll.u32 %s3, 4
      %s243 = int_to_ptr.hbm [resolvable:$true] %s242
      %248 = dma.vmem_to_hbm [thread:$0]  %s241, 768, %s243, [#allocation5], 384, 384, 24
    $region37: #{tpu_custom_call.1} parent=1 // pred_fallthru
      _
    // Predicated region
    $region38: #{tpu_custom_call.1} parent=1 // pred_check
      _
    $region39: #{tpu_custom_call.1} parent=1 // pred_check_branch
      %250 = sbr.rel (0) target = $region41
    $region40: #{tpu_custom_call.1} parent=1 // pred_region
      %252 = dma.done [#allocation5], 768
    $region41: #{tpu_custom_call.1} parent=1 // pred_fallthru
      _
    %253 = vsyncpa [#allocation4], 1
    %254 = vsyncpa [#allocation7], 1
    %255 = vsyncpa [#allocation5], 1

</llo_original>
